<compile_context>
chip_gen: v7x
topology: tpu7x:2x2x1
jax: 0.10.0
libtpu: 0.0.40
codegen_flags: <defaults>
</compile_context>

<pallas_src>
import functools

import jax
import jax.numpy as jnp
from jax.experimental import pallas as pl
from jax.experimental.pallas import tpu as pltpu


def _round_up(a: int, m: int) -> int:
    return (a + m - 1) // m * m


def _cdiv(a: int, b: int) -> int:
    return (a + b - 1) // b


def _ae_kernel(
    x_ref,                # (TB, D)    bf16 input tile
    w1_ref, b1_ref,       # (D, H)  bf16, (1, H)  f32
    w2_ref, b2_ref,       # (H, Kp) bf16, (1, Kp) f32   (Kp = lane-padded intrinsic dim)
    w3_ref, b3_ref,       # (K, H) or (Kp, H) f32, (1, H) f32
    w4_ref, b4_ref,       # (H, D)  bf16, (1, D)  f32
    dec_ref,              # (TB, D)    decoded output (decoded_dtype)
    enc_ref,              # (TB, Kp)   f32 encoded output (lane-dense, zero-padded)
    *,
    intrinsic_dim: int,
    mxu_decoder_entry: bool,
):
    tb = x_ref.shape[0]
    h = w3_ref.shape[1]

    # ---- encoder layer 1: (TB,D)@(D,H) on MXU, bf16 operands, f32 accumulate ----
    h1 = jnp.dot(x_ref[...], w1_ref[...],
                 preferred_element_type=jnp.float32) + b1_ref[...]
    h1 = jnp.maximum(h1, 0.0)                                    # ReLU (VPU, f32)

    # ---- encoder layer 2 (head): bf16 operands, lane-dense (TB,H)@(H,Kp) ----
    enc = jnp.dot(h1.astype(jnp.bfloat16), w2_ref[...],
                  preferred_element_type=jnp.float32) + b2_ref[...]
    enc_ref[...] = enc.astype(enc_ref.dtype)                     # unmasked vst (Kp=128)

    # ---- decoder layer 1: contraction over intrinsic_dim ----
    if mxu_decoder_entry:
        # K large enough that one MXU pass beats the serial VPU FMA chain.
        # w3 is zero-padded to Kp rows and the padded enc lanes are exactly 0,
        # so the extra contraction terms vanish.
        h2 = jnp.dot(enc, w3_ref[...],
                     preferred_element_type=jnp.float32) + b3_ref[...]
    else:
        # Tiny K: K broadcast multiply-adds on the VPU instead of a nearly
        # empty MXU pass.
        h2 = jnp.broadcast_to(b3_ref[...], (tb, h))
        for j in range(intrinsic_dim):                           # static unroll
            h2 = h2 + enc[:, j:j + 1] * w3_ref[j:j + 1, :]
    h2 = jnp.maximum(h2, 0.0)                                    # ReLU

    # ---- decoder layer 2: (TB,H)@(H,D) on MXU, bf16 operands, f32 accumulate ----
    dec = jnp.dot(h2.astype(jnp.bfloat16), w4_ref[...],
                  preferred_element_type=jnp.float32) + b4_ref[...]
    # Sigmoid: exp stays on the EUP, the divide becomes an approx reciprocal
    # (separate cheap path) -> relieves the single EUP on v5e.
    dec = jnp.clip(dec, -30.0, 30.0)
    sig = pl.reciprocal(1.0 + jnp.exp(-dec), approx=True)
    dec_ref[...] = sig.astype(dec_ref.dtype)


def autoencoder_forward(x_nchw, params, *, batch_tile: int = 1024,
                        decoded_dtype=jnp.float32):
    """Returns (decoded, encoded), matching AbstractAutoEncoder.forward.

    x_nchw: (N, C, H, W), flattened to (N, C*H*W) for the MLP autoencoder.
    decoded_dtype: jnp.float32 (default, faithful) or jnp.bfloat16 (halves the
      largest HBM write if the caller accepts bf16 reconstructions).
    """
    n = x_nchw.shape[0]
    d = int(x_nchw.shape[1] * x_nchw.shape[2] * x_nchw.shape[3])
    # bf16 input stream: halves x's HBM/DMA bytes; accumulation stays f32.
    x = x_nchw.reshape(n, d).astype(jnp.bfloat16)

    w1, b1, w2, b2, w3, b3, w4, b4 = params
    hidden = w1.shape[1]
    k = w2.shape[1]                       # intrinsic_dim

    # Lane-dense padding of the narrow encoded output (K -> multiple of 128);
    # padded w2 columns / b2 entries are zero so padded enc lanes are exactly 0.
    k_pad = _round_up(max(k, 1), 128)
    w2p = jnp.zeros((hidden, k_pad), jnp.bfloat16).at[:, :k].set(w2.astype(jnp.bfloat16))
    b2p = jnp.zeros((1, k_pad), jnp.float32).at[:, :k].set(b2.astype(jnp.float32))

    # Decoder-entry crossover: VPU broadcast-FMA for tiny K, single MXU pass
    # (over the full lane-padded enc) once K grows past ~8.
    mxu_decoder_entry = k > 8
    if mxu_decoder_entry:
        w3k = jnp.zeros((k_pad, hidden), jnp.float32).at[:k, :].set(w3.astype(jnp.float32))
    else:
        w3k = w3.astype(jnp.float32)

    # bf16 storage for the two big weight matrices (halves their DMA bytes).
    w1_bf = w1.astype(jnp.bfloat16)
    w4_bf = w4.astype(jnp.bfloat16)

    # Batch tile: multiple of 16 (bf16 packs 16 rows/sublane), default 1024.
    # At tb=1024: x(bf16) 2 MiB + dec(f32) 4 MiB + enc 0.5 MiB, x2 buffers
    # ~13 MiB + ~0.3 MiB resident weights -> fits v7x's 32 MiB scoped VMEM.
    batch_tile = max(16, _round_up(batch_tile, 16))
    tb = min(batch_tile, _round_up(n, 16))
    # v7x megacore: keep >=2 grid steps whenever the batch is big enough to
    # split, so ("parallel",) can shard rows across both TensorCores.
    if n > 16:
        tb = min(tb, _round_up(_cdiv(n, 2), 16))
    n_pad = _round_up(n, tb)
    if n_pad != n:
        x = jnp.pad(x, ((0, n_pad - n), (0, 0)))
    grid = (n_pad // tb,)

    def row_spec(last):
        return pl.BlockSpec((tb, last), lambda i: (i, 0))

    def resident(shape):
        # Constant block index -> DMA'd once, stays VMEM-resident across steps.
        return pl.BlockSpec(shape, lambda i: (0, 0))

    dec_bytes = jnp.dtype(decoded_dtype).itemsize
    cost = pl.CostEstimate(
        flops=int(4 * n_pad * d * hidden               # two big matmuls
                  + 2 * n_pad * hidden * k_pad         # encoder head
                  + 2 * n_pad * k_pad * hidden),       # decoder entry
        transcendentals=int(n_pad * d),                # sigmoid exp
        bytes_accessed=int(n_pad * d * 2               # x (bf16)
                           + n_pad * d * dec_bytes     # decoded
                           + n_pad * k_pad * 4         # encoded
                           + (w1_bf.size + w2p.size + w4_bf.size) * 2
                           + (w3k.size + b1.size + b2p.size + b3.size + b4.size) * 4),
    )

    kernel = functools.partial(_ae_kernel, intrinsic_dim=k,
                               mxu_decoder_entry=mxu_decoder_entry)

    dec_flat, enc_pad = pl.pallas_call(
        kernel,
        out_shape=(
            jax.ShapeDtypeStruct((n_pad, d), decoded_dtype),    # decoded
            jax.ShapeDtypeStruct((n_pad, k_pad), jnp.float32),  # encoded (padded)
        ),
        grid=grid,
        in_specs=[
            row_spec(d),                                      # x (bf16)
            resident((d, hidden)), resident((1, hidden)),     # w1, b1
            resident((hidden, k_pad)), resident((1, k_pad)),  # w2 (padded), b2
            resident(w3k.shape), resident((1, hidden)),       # w3, b3
            resident((hidden, d)), resident((1, d)),          # w4, b4
        ],
        out_specs=(row_spec(d), row_spec(k_pad)),
        compiler_params=pltpu.CompilerParams(
            dimension_semantics=("parallel",),
            vmem_limit_bytes=32 * 1024 * 1024,
        ),
        cost_estimate=cost,
    )(x, w1_bf, b1.astype(jnp.float32), w2p, b2p,
      w3k, b3.astype(jnp.float32), w4_bf, b4.astype(jnp.float32))

    decoded = dec_flat[:n].reshape(x_nchw.shape)
    encoded = enc_pad[:n, :k]
    return decoded, encoded


def init_params(key, d, hidden, intrinsic_dim):
    """Deterministic parameter init (uniform, PyTorch-Linear-like fan_in scaling)."""
    ks = jax.random.split(key, 8)

    def lin(kw, kb, fan_in, fan_out):
        bound = 1.0 / jnp.sqrt(jnp.float32(fan_in))
        w = jax.random.uniform(kw, (fan_in, fan_out), jnp.float32, -bound, bound)
        b = jax.random.uniform(kb, (1, fan_out), jnp.float32, -bound, bound)
        return w, b

    w1, b1 = lin(ks[0], ks[1], d, hidden)
    w2, b2 = lin(ks[2], ks[3], hidden, intrinsic_dim)
    w3, b3 = lin(ks[4], ks[5], intrinsic_dim, hidden)
    w4, b4 = lin(ks[6], ks[7], hidden, d)
    return (w1, b1, w2, b2, w3, b3, w4, b4)


def _reference_forward(x_nchw, params):
    """Pure-JAX reference with the same dtype policy (bf16 x/w1/w2/w4, f32 acc)."""
    n = x_nchw.shape[0]
    d = int(x_nchw.shape[1] * x_nchw.shape[2] * x_nchw.shape[3])
    x = x_nchw.reshape(n, d).astype(jnp.bfloat16)
    w1, b1, w2, b2, w3, b3, w4, b4 = params
    h1 = jnp.maximum(
        jnp.dot(x, w1.astype(jnp.bfloat16),
                preferred_element_type=jnp.float32) + b1, 0.0)
    enc = jnp.dot(h1.astype(jnp.bfloat16), w2.astype(jnp.bfloat16),
                  preferred_element_type=jnp.float32) + b2
    h2 = jnp.maximum(jnp.dot(enc, w3, preferred_element_type=jnp.float32) + b3, 0.0)
    dec = jax.nn.sigmoid(
        jnp.dot(h2.astype(jnp.bfloat16), w4.astype(jnp.bfloat16),
                preferred_element_type=jnp.float32) + b4)
    return dec.reshape(x_nchw.shape), enc


if __name__ == "__main__":
    key = jax.random.PRNGKey(0)
    k_x, k_p = jax.random.split(key)

    # Small NCHW input, consistent with an autoencoder on image-like data.
    N, C, H, W = 2, 4, 16, 16
    D = C * H * W          # 1024 flattened features
    HIDDEN = 32
    INTRINSIC_DIM = 2      # default intrinsic_dim of AbstractAutoEncoder

    x = jax.random.normal(k_x, (N, C, H, W), dtype=jnp.float32)
    params = init_params(k_p, D, HIDDEN, INTRINSIC_DIM)

    decoded, encoded = jax.jit(autoencoder_forward)(x, params)
    jax.block_until_ready((decoded, encoded))

    assert decoded.shape == (N, C, H, W), decoded.shape
    assert encoded.shape == (N, INTRINSIC_DIM), encoded.shape

    ref_dec, ref_enc = jax.jit(_reference_forward)(x, params)
    jax.block_until_ready((ref_dec, ref_enc))
    assert jnp.allclose(decoded, ref_dec, atol=5e-2, rtol=5e-2)
    assert jnp.allclose(encoded, ref_enc, atol=5e-2, rtol=5e-2)

    print("KERNEL_OK")
</pallas_src>

<mosaic_0001>
module attributes {stable_mosaic.version = 11 : i64} {
  func.func @_ae_kernel(%arg0: i32, %arg1: memref<16x1024xbf16, #tpu.memory_space<vmem>>, %arg2: memref<1024x32xbf16, #tpu.memory_space<vmem>>, %arg3: memref<1x32xf32, #tpu.memory_space<vmem>>, %arg4: memref<32x128xbf16, #tpu.memory_space<vmem>>, %arg5: memref<1x128xf32, #tpu.memory_space<vmem>>, %arg6: memref<2x32xf32, #tpu.memory_space<vmem>>, %arg7: memref<1x32xf32, #tpu.memory_space<vmem>>, %arg8: memref<32x1024xbf16, #tpu.memory_space<vmem>>, %arg9: memref<1x1024xf32, #tpu.memory_space<vmem>>, %arg10: memref<16x1024xf32, #tpu.memory_space<vmem>>, %arg11: memref<16x128xf32, #tpu.memory_space<vmem>>) attributes {dimension_semantics = [#tpu.dimension_semantics<parallel>], iteration_bounds = array<i64: 1>, scalar_prefetch = 0 : i64, scratch_operands = 0 : i64, tpu.core_type = #tpu.core_type<tc>, window_params = [{transform_indices = @transform_0, window_bounds = array<i64: 16, 1024>}, {pipeline_mode = #tpu.pipeline_mode<synchronous>, transform_indices = @transform_1, window_bounds = array<i64: 1024, 32>}, {pipeline_mode = #tpu.pipeline_mode<synchronous>, transform_indices = @transform_2, window_bounds = array<i64: 1, 32>}, {pipeline_mode = #tpu.pipeline_mode<synchronous>, transform_indices = @transform_3, window_bounds = array<i64: 32, 128>}, {pipeline_mode = #tpu.pipeline_mode<synchronous>, transform_indices = @transform_4, window_bounds = array<i64: 1, 128>}, {pipeline_mode = #tpu.pipeline_mode<synchronous>, transform_indices = @transform_5, window_bounds = array<i64: 2, 32>}, {pipeline_mode = #tpu.pipeline_mode<synchronous>, transform_indices = @transform_6, window_bounds = array<i64: 1, 32>}, {pipeline_mode = #tpu.pipeline_mode<synchronous>, transform_indices = @transform_7, window_bounds = array<i64: 32, 1024>}, {pipeline_mode = #tpu.pipeline_mode<synchronous>, transform_indices = @transform_8, window_bounds = array<i64: 1, 1024>}, {transform_indices = @transform_9, window_bounds = array<i64: 16, 1024>}, {transform_indices = @transform_10, window_bounds = array<i64: 16, 128>}]} {
    %c0 = arith.constant 0 : index
    %c0_0 = arith.constant 0 : index
    %0 = vector.load %arg1[%c0, %c0_0] : memref<16x1024xbf16, #tpu.memory_space<vmem>>, vector<16x1024xbf16>
    %c0_1 = arith.constant 0 : index
    %c0_2 = arith.constant 0 : index
    %1 = vector.load %arg2[%c0_1, %c0_2] : memref<1024x32xbf16, #tpu.memory_space<vmem>>, vector<1024x32xbf16>
    %cst = arith.constant dense<0.000000e+00> : vector<16x32xf32>
    %2 = tpu.matmul %0, %1, %cst {dimension_numbers = #tpu.dot_dimension_numbers<[1], [0], [0], [1], [0, 0, 1, 1], [], []>} : vector<16x1024xbf16>, vector<1024x32xbf16>, vector<16x32xf32> -> vector<16x32xf32>
    %c0_3 = arith.constant 0 : index
    %c0_4 = arith.constant 0 : index
    %3 = vector.load %arg3[%c0_3, %c0_4] : memref<1x32xf32, #tpu.memory_space<vmem>>, vector<1x32xf32>
    %4 = vector.broadcast %3 : vector<1x32xf32> to vector<16x32xf32>
    %5 = arith.addf %2, %4 : vector<16x32xf32>
    %cst_5 = arith.constant 0.000000e+00 : f32
    %6 = vector.broadcast %cst_5 : f32 to vector<16x32xf32>
    %7 = arith.maximumf %5, %6 : vector<16x32xf32>
    %8 = arith.truncf %7 : vector<16x32xf32> to vector<16x32xbf16>
    %c0_6 = arith.constant 0 : index
    %c0_7 = arith.constant 0 : index
    %9 = vector.load %arg4[%c0_6, %c0_7] : memref<32x128xbf16, #tpu.memory_space<vmem>>, vector<32x128xbf16>
    %cst_8 = arith.constant dense<0.000000e+00> : vector<16x128xf32>
    %10 = tpu.matmul %8, %9, %cst_8 {dimension_numbers = #tpu.dot_dimension_numbers<[1], [0], [0], [1], [0, 0, 1, 1], [], []>} : vector<16x32xbf16>, vector<32x128xbf16>, vector<16x128xf32> -> vector<16x128xf32>
    %c0_9 = arith.constant 0 : index
    %c0_10 = arith.constant 0 : index
    %11 = vector.load %arg5[%c0_9, %c0_10] : memref<1x128xf32, #tpu.memory_space<vmem>>, vector<1x128xf32>
    %12 = vector.broadcast %11 : vector<1x128xf32> to vector<16x128xf32>
    %13 = arith.addf %10, %12 : vector<16x128xf32>
    %c0_11 = arith.constant 0 : index
    %c0_12 = arith.constant 0 : index
    %14 = vector.load %arg11[%c0_11, %c0_12] : memref<16x128xf32, #tpu.memory_space<vmem>>, vector<16x128xf32>
    tpu.vector_store %arg11[%c0_11, %c0_12], %13 {strides = array<i32>} : memref<16x128xf32, #tpu.memory_space<vmem>>, vector<16x128xf32>,
    %c0_13 = arith.constant 0 : index
    %c0_14 = arith.constant 0 : index
    %15 = vector.load %arg7[%c0_13, %c0_14] : memref<1x32xf32, #tpu.memory_space<vmem>>, vector<1x32xf32>
    %16 = vector.shape_cast %15 : vector<1x32xf32> to vector<1x32xf32>
    %17 = vector.broadcast %16 : vector<1x32xf32> to vector<16x32xf32>
    %18 = vector.extract_strided_slice %13 {offsets = [0, 0], sizes = [16, 1], strides = [1, 1]} : vector<16x128xf32> to vector<16x1xf32>
    %c0_15 = arith.constant 0 : index
    %c0_16 = arith.constant 0 : index
    %19 = vector.load %arg6[%c0_15, %c0_16] : memref<2x32xf32, #tpu.memory_space<vmem>>, vector<1x32xf32>
    %20 = vector.broadcast %18 : vector<16x1xf32> to vector<16x32xf32>
    %21 = vector.broadcast %19 : vector<1x32xf32> to vector<16x32xf32>
    %22 = arith.mulf %20, %21 : vector<16x32xf32>
    %23 = arith.addf %17, %22 : vector<16x32xf32>
    %24 = vector.extract_strided_slice %13 {offsets = [0, 1], sizes = [16, 1], strides = [1, 1]} : vector<16x128xf32> to vector<16x1xf32>
    %c1 = arith.constant 1 : index
    %c0_17 = arith.constant 0 : index
    %25 = vector.load %arg6[%c1, %c0_17] : memref<2x32xf32, #tpu.memory_space<vmem>>, vector<1x32xf32>
    %26 = vector.broadcast %24 : vector<16x1xf32> to vector<16x32xf32>
    %27 = vector.broadcast %25 : vector<1x32xf32> to vector<16x32xf32>
    %28 = arith.mulf %26, %27 : vector<16x32xf32>
    %29 = arith.addf %23, %28 : vector<16x32xf32>
    %cst_18 = arith.constant 0.000000e+00 : f32
    %30 = vector.broadcast %cst_18 : f32 to vector<16x32xf32>
    %31 = arith.maximumf %29, %30 : vector<16x32xf32>
    %32 = arith.truncf %31 : vector<16x32xf32> to vector<16x32xbf16>
    %c0_19 = arith.constant 0 : index
    %c0_20 = arith.constant 0 : index
    %33 = vector.load %arg8[%c0_19, %c0_20] : memref<32x1024xbf16, #tpu.memory_space<vmem>>, vector<32x1024xbf16>
    %cst_21 = arith.constant dense<0.000000e+00> : vector<16x1024xf32>
    %34 = tpu.matmul %32, %33, %cst_21 {dimension_numbers = #tpu.dot_dimension_numbers<[1], [0], [0], [1], [0, 0, 1, 1], [], []>} : vector<16x32xbf16>, vector<32x1024xbf16>, vector<16x1024xf32> -> vector<16x1024xf32>
    %c0_22 = arith.constant 0 : index
    %c0_23 = arith.constant 0 : index
    %35 = vector.load %arg9[%c0_22, %c0_23] : memref<1x1024xf32, #tpu.memory_space<vmem>>, vector<1x1024xf32>
    %36 = vector.broadcast %35 : vector<1x1024xf32> to vector<16x1024xf32>
    %37 = arith.addf %34, %36 : vector<16x1024xf32>
    %cst_24 = arith.constant -3.000000e+01 : f32
    %cst_25 = arith.constant 3.000000e+01 : f32
    %38 = vector.broadcast %cst_24 : f32 to vector<16x1024xf32>
    %39 = arith.maximumf %38, %37 : vector<16x1024xf32>
    %40 = vector.broadcast %cst_25 : f32 to vector<16x1024xf32>
    %41 = arith.minimumf %40, %39 : vector<16x1024xf32>
    %cst_26 = arith.constant 0.000000e+00 : f32
    %42 = vector.broadcast %cst_26 : f32 to vector<16x1024xf32>
    %43 = arith.subf %42, %41 : vector<16x1024xf32>
    %44 = math.exp %43 : vector<16x1024xf32>
    %cst_27 = arith.constant 1.000000e+00 : f32
    %45 = vector.broadcast %cst_27 : f32 to vector<16x1024xf32>
    %46 = arith.addf %45, %44 : vector<16x1024xf32>
    %47 = tpu.reciprocal %46 {approx = true} : vector<16x1024xf32> -> vector<16x1024xf32>
    %c0_28 = arith.constant 0 : index
    %c0_29 = arith.constant 0 : index
    %48 = vector.load %arg10[%c0_28, %c0_29] : memref<16x1024xf32, #tpu.memory_space<vmem>>, vector<16x1024xf32>
    tpu.vector_store %arg10[%c0_28, %c0_29], %47 {strides = array<i32>} : memref<16x1024xf32, #tpu.memory_space<vmem>>, vector<16x1024xf32>,
    return
  }
  func.func @transform_0(%arg0: i32) -> (i32, i32) {
    %c0_i32 = arith.constant 0 : i32
    %c0_i32_0 = arith.constant 0 : i32
    return %arg0, %c0_i32 : i32, i32
  }
  func.func @transform_1(%arg0: i32) -> (i32, i32) {
    %c0_i32 = arith.constant 0 : i32
    %c0_i32_0 = arith.constant 0 : i32
    %c0_i32_1 = arith.constant 0 : i32
    return %c0_i32, %c0_i32_0 : i32, i32
  }
  func.func @transform_2(%arg0: i32) -> (i32, i32) {
    %c0_i32 = arith.constant 0 : i32
    %c0_i32_0 = arith.constant 0 : i32
    %c0_i32_1 = arith.constant 0 : i32
    return %c0_i32, %c0_i32_0 : i32, i32
  }
  func.func @transform_3(%arg0: i32) -> (i32, i32) {
    %c0_i32 = arith.constant 0 : i32
    %c0_i32_0 = arith.constant 0 : i32
    %c0_i32_1 = arith.constant 0 : i32
    return %c0_i32, %c0_i32_0 : i32, i32
  }
  func.func @transform_4(%arg0: i32) -> (i32, i32) {
    %c0_i32 = arith.constant 0 : i32
    %c0_i32_0 = arith.constant 0 : i32
    %c0_i32_1 = arith.constant 0 : i32
    return %c0_i32, %c0_i32_0 : i32, i32
  }
  func.func @transform_5(%arg0: i32) -> (i32, i32) {
    %c0_i32 = arith.constant 0 : i32
    %c0_i32_0 = arith.constant 0 : i32
    %c0_i32_1 = arith.constant 0 : i32
    return %c0_i32, %c0_i32_0 : i32, i32
  }
  func.func @transform_6(%arg0: i32) -> (i32, i32) {
    %c0_i32 = arith.constant 0 : i32
    %c0_i32_0 = arith.constant 0 : i32
    %c0_i32_1 = arith.constant 0 : i32
    return %c0_i32, %c0_i32_0 : i32, i32
  }
  func.func @transform_7(%arg0: i32) -> (i32, i32) {
    %c0_i32 = arith.constant 0 : i32
    %c0_i32_0 = arith.constant 0 : i32
    %c0_i32_1 = arith.constant 0 : i32
    return %c0_i32, %c0_i32_0 : i32, i32
  }
  func.func @transform_8(%arg0: i32) -> (i32, i32) {
    %c0_i32 = arith.constant 0 : i32
    %c0_i32_0 = arith.constant 0 : i32
    %c0_i32_1 = arith.constant 0 : i32
    return %c0_i32, %c0_i32_0 : i32, i32
  }
  func.func @transform_9(%arg0: i32) -> (i32, i32) {
    %c0_i32 = arith.constant 0 : i32
    %c0_i32_0 = arith.constant 0 : i32
    return %arg0, %c0_i32 : i32, i32
  }
  func.func @transform_10(%arg0: i32) -> (i32, i32) {
    %c0_i32 = arith.constant 0 : i32
    %c0_i32_0 = arith.constant 0 : i32
    return %arg0, %c0_i32 : i32, i32
  }
}

</mosaic_0001>

<llo_original>
// kernel: autoencoder_forward.1
$region0: #{autoencoder_forward.1}
  #allocation0 [shape = 'u32[]', space=smem, size = 0x4, offset = 0x4, fixed_abs, tag = 'smem constant byte address 0x4 - core index']
  #allocation1 [shape = 'u32[144,128]{1,0:T(1,128)}', space=vmem, size = 0x12000, scoped, tag = 'internal scratch']
  %s0 = inlined_call_operand.vmem [shape: bf16[16,1024], index: 0, kind: input, shape index: {}]
  %s1 = inlined_call_operand.vmem [shape: bf16[1024,32], index: 1, kind: input, shape index: {}]
  %s2 = inlined_call_operand.vmem [shape: f32[1,32], index: 2, kind: input, shape index: {}]
  %s3 = inlined_call_operand.vmem [shape: bf16[32,128], index: 3, kind: input, shape index: {}]
  %s4 = inlined_call_operand.vmem [shape: f32[1,128], index: 4, kind: input, shape index: {}]
  %s5 = inlined_call_operand.vmem [shape: f32[2,32], index: 5, kind: input, shape index: {}]
  %s6 = inlined_call_operand.vmem [shape: f32[1,32], index: 6, kind: input, shape index: {}]
  %s7 = inlined_call_operand.vmem [shape: bf16[32,1024], index: 7, kind: input, shape index: {}]
  %s8 = inlined_call_operand.vmem [shape: f32[1,1024], index: 8, kind: input, shape index: {}]
  %s9 = inlined_call_operand.vmem [shape: f32[16,1024], index: 9, kind: output, shape index: {0}]
  %s10 = inlined_call_operand.vmem [shape: f32[16,128], index: 10, kind: output, shape index: {1}]
  %11 = xla_tuple %s9, %s10
  %s12 = sld [smem:[#allocation0]]
  $region54: #{autoencoder_forward.1} parent=0
    _
  %s14 = ssub.s32 1, %s12
  %s15 = scalar_select 0, %s14, %s12
  // Predicated region
  $region2: #{autoencoder_forward.1} parent=0 // pred_check
    _
  $region3: #{autoencoder_forward.1} parent=0 // pred_check_branch
    %17 = sbr.rel (0) target = $region5
  $region4: #{autoencoder_forward.1} parent=0 // pred_region
    _
  $region5: #{autoencoder_forward.1} parent=0 // pred_fallthru
    _
  // Predicated region
  $region6: #{autoencoder_forward.1} parent=0 // pred_check
    _
  $region7: #{autoencoder_forward.1} parent=0 // pred_check_branch
    %19 = sbr.rel (0) target = $region9
  $region8: #{autoencoder_forward.1} parent=0 // pred_region
    _
  $region9: #{autoencoder_forward.1} parent=0 // pred_fallthru
    _
  // Predicated region
  $region10: #{autoencoder_forward.1} parent=0 // pred_check
    _
  $region11: #{autoencoder_forward.1} parent=0 // pred_check_branch
    %21 = sbr.rel (0) target = $region13
  $region12: #{autoencoder_forward.1} parent=0 // pred_region
    _
  $region13: #{autoencoder_forward.1} parent=0 // pred_fallthru
    _
  // Predicated region
  $region14: #{autoencoder_forward.1} parent=0 // pred_check
    _
  $region15: #{autoencoder_forward.1} parent=0 // pred_check_branch
    %23 = sbr.rel (0) target = $region17
  $region16: #{autoencoder_forward.1} parent=0 // pred_region
    _
  $region17: #{autoencoder_forward.1} parent=0 // pred_fallthru
    _
  // Predicated region
  $region18: #{autoencoder_forward.1} parent=0 // pred_check
    _
  $region19: #{autoencoder_forward.1} parent=0 // pred_check_branch
    %25 = sbr.rel (0) target = $region21
  $region20: #{autoencoder_forward.1} parent=0 // pred_region
    _
  $region21: #{autoencoder_forward.1} parent=0 // pred_fallthru
    _
  // Predicated region
  $region22: #{autoencoder_forward.1} parent=0 // pred_check
    _
  $region23: #{autoencoder_forward.1} parent=0 // pred_check_branch
    %27 = sbr.rel (0) target = $region25
  $region24: #{autoencoder_forward.1} parent=0 // pred_region
    _
  $region25: #{autoencoder_forward.1} parent=0 // pred_fallthru
    _
  // Predicated region
  $region26: #{autoencoder_forward.1} parent=0 // pred_check
    _
  $region27: #{autoencoder_forward.1} parent=0 // pred_check_branch
    %29 = sbr.rel (0) target = $region29
  $region28: #{autoencoder_forward.1} parent=0 // pred_region
    _
  $region29: #{autoencoder_forward.1} parent=0 // pred_fallthru
    _
  // Predicated region
  $region30: #{autoencoder_forward.1} parent=0 // pred_check
    _
  $region31: #{autoencoder_forward.1} parent=0 // pred_check_branch
    %31 = sbr.rel (0) target = $region33
  $region32: #{autoencoder_forward.1} parent=0 // pred_region
    _
  $region33: #{autoencoder_forward.1} parent=0 // pred_fallthru
    _
  // Predicated region
  $region34: #{autoencoder_forward.1} parent=0 // pred_check
    _
  $region35: #{autoencoder_forward.1} parent=0 // pred_check_branch
    %33 = sbr.rel (0) target = $region37
  $region36: #{autoencoder_forward.1} parent=0 // pred_region
    _
  $region37: #{autoencoder_forward.1} parent=0 // pred_fallthru
    _
  %v35 = vld [vmem:[%s0] sm:$0xff]
  %v36 = vld [vmem:[%s0 + $0x8] sm:$0xff]
  %v37 = vld [vmem:[%s0 + $0x10] sm:$0xff]
  %v38 = vld [vmem:[%s0 + $0x18] sm:$0xff]
  %v39 = vld [vmem:[%s0 + $0x20] sm:$0xff]
  %v40 = vld [vmem:[%s0 + $0x28] sm:$0xff]
  %v41 = vld [vmem:[%s0 + $0x30] sm:$0xff]
  %v42 = vld [vmem:[%s0 + $0x38] sm:$0xff]
  %v43 = vld [vmem:[%s1] sm:$0xf]
  %v44 = vld [vmem:[%s1 + $0x4] sm:$0xf]
  %v45 = vld [vmem:[%s1 + $0x8] sm:$0xf]
  %v46 = vld [vmem:[%s1 + $0xc] sm:$0xf]
  %v47 = vld [vmem:[%s1 + $0x10] sm:$0xf]
  %v48 = vld [vmem:[%s1 + $0x14] sm:$0xf]
  %v49 = vld [vmem:[%s1 + $0x18] sm:$0xf]
  %v50 = vld [vmem:[%s1 + $0x1c] sm:$0xf]
  %v51 = vld [vmem:[%s1 + $0x20] sm:$0xf]
  %v52 = vld [vmem:[%s1 + $0x24] sm:$0xf]
  %v53 = vld [vmem:[%s1 + $0x28] sm:$0xf]
  %v54 = vld [vmem:[%s1 + $0x2c] sm:$0xf]
  %v55 = vld [vmem:[%s1 + $0x30] sm:$0xf]
  %v56 = vld [vmem:[%s1 + $0x34] sm:$0xf]
  %v57 = vld [vmem:[%s1 + $0x38] sm:$0xf]
  %v58 = vld [vmem:[%s1 + $0x3c] sm:$0xf]
  %v59 = vld [vmem:[%s1 + $0x40] sm:$0xf]
  %v60 = vld [vmem:[%s1 + $0x44] sm:$0xf]
  %v61 = vld [vmem:[%s1 + $0x48] sm:$0xf]
  %v62 = vld [vmem:[%s1 + $0x4c] sm:$0xf]
  %v63 = vld [vmem:[%s1 + $0x50] sm:$0xf]
  %v64 = vld [vmem:[%s1 + $0x54] sm:$0xf]
  %v65 = vld [vmem:[%s1 + $0x58] sm:$0xf]
  %v66 = vld [vmem:[%s1 + $0x5c] sm:$0xf]
  %v67 = vld [vmem:[%s1 + $0x60] sm:$0xf]
  %v68 = vld [vmem:[%s1 + $0x64] sm:$0xf]
  %v69 = vld [vmem:[%s1 + $0x68] sm:$0xf]
  %v70 = vld [vmem:[%s1 + $0x6c] sm:$0xf]
  %v71 = vld [vmem:[%s1 + $0x70] sm:$0xf]
  %v72 = vld [vmem:[%s1 + $0x74] sm:$0xf]
  %v73 = vld [vmem:[%s1 + $0x78] sm:$0xf]
  %v74 = vld [vmem:[%s1 + $0x7c] sm:$0xf]
  %v75 = vld [vmem:[%s1 + $0x80] sm:$0xf]
  %v76 = vld [vmem:[%s1 + $0x84] sm:$0xf]
  %v77 = vld [vmem:[%s1 + $0x88] sm:$0xf]
  %v78 = vld [vmem:[%s1 + $0x8c] sm:$0xf]
  %v79 = vld [vmem:[%s1 + $0x90] sm:$0xf]
  %v80 = vld [vmem:[%s1 + $0x94] sm:$0xf]
  %v81 = vld [vmem:[%s1 + $0x98] sm:$0xf]
  %v82 = vld [vmem:[%s1 + $0x9c] sm:$0xf]
  %v83 = vld [vmem:[%s1 + $0xa0] sm:$0xf]
  %v84 = vld [vmem:[%s1 + $0xa4] sm:$0xf]
  %v85 = vld [vmem:[%s1 + $0xa8] sm:$0xf]
  %v86 = vld [vmem:[%s1 + $0xac] sm:$0xf]
  %v87 = vld [vmem:[%s1 + $0xb0] sm:$0xf]
  %v88 = vld [vmem:[%s1 + $0xb4] sm:$0xf]
  %v89 = vld [vmem:[%s1 + $0xb8] sm:$0xf]
  %v90 = vld [vmem:[%s1 + $0xbc] sm:$0xf]
  %v91 = vld [vmem:[%s1 + $0xc0] sm:$0xf]
  %v92 = vld [vmem:[%s1 + $0xc4] sm:$0xf]
  %v93 = vld [vmem:[%s1 + $0xc8] sm:$0xf]
  %v94 = vld [vmem:[%s1 + $0xcc] sm:$0xf]
  %v95 = vld [vmem:[%s1 + $0xd0] sm:$0xf]
  %v96 = vld [vmem:[%s1 + $0xd4] sm:$0xf]
  %v97 = vld [vmem:[%s1 + $0xd8] sm:$0xf]
  %v98 = vld [vmem:[%s1 + $0xdc] sm:$0xf]
  %v99 = vld [vmem:[%s1 + $0xe0] sm:$0xf]
  %v100 = vld [vmem:[%s1 + $0xe4] sm:$0xf]
  %v101 = vld [vmem:[%s1 + $0xe8] sm:$0xf]
  %v102 = vld [vmem:[%s1 + $0xec] sm:$0xf]
  %v103 = vld [vmem:[%s1 + $0xf0] sm:$0xf]
  %v104 = vld [vmem:[%s1 + $0xf4] sm:$0xf]
  %v105 = vld [vmem:[%s1 + $0xf8] sm:$0xf]
  %v106 = vld [vmem:[%s1 + $0xfc] sm:$0xf]
  %v107 = vld [vmem:[%s1 + $0x100] sm:$0xf]
  %v108 = vld [vmem:[%s1 + $0x104] sm:$0xf]
  %v109 = vld [vmem:[%s1 + $0x108] sm:$0xf]
  %v110 = vld [vmem:[%s1 + $0x10c] sm:$0xf]
  %v111 = vld [vmem:[%s1 + $0x110] sm:$0xf]
  %v112 = vld [vmem:[%s1 + $0x114] sm:$0xf]
  %v113 = vld [vmem:[%s1 + $0x118] sm:$0xf]
  %v114 = vld [vmem:[%s1 + $0x11c] sm:$0xf]
  %v115 = vld [vmem:[%s1 + $0x120] sm:$0xf]
  %v116 = vld [vmem:[%s1 + $0x124] sm:$0xf]
  %v117 = vld [vmem:[%s1 + $0x128] sm:$0xf]
  %v118 = vld [vmem:[%s1 + $0x12c] sm:$0xf]
  %v119 = vld [vmem:[%s1 + $0x130] sm:$0xf]
  %v120 = vld [vmem:[%s1 + $0x134] sm:$0xf]
  %v121 = vld [vmem:[%s1 + $0x138] sm:$0xf]
  %v122 = vld [vmem:[%s1 + $0x13c] sm:$0xf]
  %v123 = vld [vmem:[%s1 + $0x140] sm:$0xf]
  %v124 = vld [vmem:[%s1 + $0x144] sm:$0xf]
  %v125 = vld [vmem:[%s1 + $0x148] sm:$0xf]
  %v126 = vld [vmem:[%s1 + $0x14c] sm:$0xf]
  %v127 = vld [vmem:[%s1 + $0x150] sm:$0xf]
  %v128 = vld [vmem:[%s1 + $0x154] sm:$0xf]
  %v129 = vld [vmem:[%s1 + $0x158] sm:$0xf]
  %v130 = vld [vmem:[%s1 + $0x15c] sm:$0xf]
  %v131 = vld [vmem:[%s1 + $0x160] sm:$0xf]
  %v132 = vld [vmem:[%s1 + $0x164] sm:$0xf]
  %v133 = vld [vmem:[%s1 + $0x168] sm:$0xf]
  %v134 = vld [vmem:[%s1 + $0x16c] sm:$0xf]
  %v135 = vld [vmem:[%s1 + $0x170] sm:$0xf]
  %v136 = vld [vmem:[%s1 + $0x174] sm:$0xf]
  %v137 = vld [vmem:[%s1 + $0x178] sm:$0xf]
  %v138 = vld [vmem:[%s1 + $0x17c] sm:$0xf]
  %v139 = vld [vmem:[%s1 + $0x180] sm:$0xf]
  %v140 = vld [vmem:[%s1 + $0x184] sm:$0xf]
  %v141 = vld [vmem:[%s1 + $0x188] sm:$0xf]
  %v142 = vld [vmem:[%s1 + $0x18c] sm:$0xf]
  %v143 = vld [vmem:[%s1 + $0x190] sm:$0xf]
  %v144 = vld [vmem:[%s1 + $0x194] sm:$0xf]
  %v145 = vld [vmem:[%s1 + $0x198] sm:$0xf]
  %v146 = vld [vmem:[%s1 + $0x19c] sm:$0xf]
  %v147 = vld [vmem:[%s1 + $0x1a0] sm:$0xf]
  %v148 = vld [vmem:[%s1 + $0x1a4] sm:$0xf]
  %v149 = vld [vmem:[%s1 + $0x1a8] sm:$0xf]
  %v150 = vld [vmem:[%s1 + $0x1ac] sm:$0xf]
  %v151 = vld [vmem:[%s1 + $0x1b0] sm:$0xf]
  %v152 = vld [vmem:[%s1 + $0x1b4] sm:$0xf]
  %v153 = vld [vmem:[%s1 + $0x1b8] sm:$0xf]
  %v154 = vld [vmem:[%s1 + $0x1bc] sm:$0xf]
  %v155 = vld [vmem:[%s1 + $0x1c0] sm:$0xf]
  %v156 = vld [vmem:[%s1 + $0x1c4] sm:$0xf]
  %v157 = vld [vmem:[%s1 + $0x1c8] sm:$0xf]
  %v158 = vld [vmem:[%s1 + $0x1cc] sm:$0xf]
  %v159 = vld [vmem:[%s1 + $0x1d0] sm:$0xf]
  %v160 = vld [vmem:[%s1 + $0x1d4] sm:$0xf]
  %v161 = vld [vmem:[%s1 + $0x1d8] sm:$0xf]
  %v162 = vld [vmem:[%s1 + $0x1dc] sm:$0xf]
  %v163 = vld [vmem:[%s1 + $0x1e0] sm:$0xf]
  %v164 = vld [vmem:[%s1 + $0x1e4] sm:$0xf]
  %v165 = vld [vmem:[%s1 + $0x1e8] sm:$0xf]
  %v166 = vld [vmem:[%s1 + $0x1ec] sm:$0xf]
  %v167 = vld [vmem:[%s1 + $0x1f0] sm:$0xf]
  %v168 = vld [vmem:[%s1 + $0x1f4] sm:$0xf]
  %v169 = vld [vmem:[%s1 + $0x1f8] sm:$0xf]
  %v170 = vld [vmem:[%s1 + $0x1fc] sm:$0xf]
  %v171 = vld [vmem:[%s2] sm:$0x1]
  %v173 = vlaneseq
  %v174 = vshrl.u32 %v173, 7
  %v175 = vsub.s32 0, %v174
  %v176 = vrot.slane %v171, %v175
  %v186 = vunpack.c.l.b16 %v35
  %v187 = vunpack.c.h.b16 %v35
  %v188 = vunpack.c.l.b16 %v36
  %v189 = vunpack.c.h.b16 %v36
  %v190 = vunpack.c.l.b16 %v37
  %v191 = vunpack.c.h.b16 %v37
  %v192 = vunpack.c.l.b16 %v38
  %v193 = vunpack.c.h.b16 %v38
  %v194 = vunpack.c.l.b16 %v39
  %v195 = vunpack.c.h.b16 %v39
  %v196 = vunpack.c.l.b16 %v40
  %v197 = vunpack.c.h.b16 %v40
  %v198 = vunpack.c.l.b16 %v41
  %v199 = vunpack.c.h.b16 %v41
  %v200 = vunpack.c.l.b16 %v42
  %v201 = vunpack.c.h.b16 %v42
  %v202 = vpack.c.b16 %v194, %v186
  %v203 = vpack.c.b16 %v195, %v187
  %v204 = vpack.c.b16 %v196, %v188
  %v205 = vpack.c.b16 %v197, %v189
  %v206 = vpack.c.b16 %v198, %v190
  %v207 = vpack.c.b16 %v199, %v191
  %v208 = vpack.c.b16 %v200, %v192
  %v209 = vpack.c.b16 %v201, %v193
  %v346 = vunpack.c.l.b16 %v43
  %v347 = vunpack.c.l.b16 %v44
  %v348 = vunpack.c.l.b16 %v45
  %v349 = vunpack.c.l.b16 %v46
  %v350 = vunpack.c.l.b16 %v47
  %v351 = vunpack.c.l.b16 %v48
  %v352 = vunpack.c.l.b16 %v49
  %v353 = vunpack.c.l.b16 %v50
  %v354 = vunpack.c.l.b16 %v51
  %v355 = vunpack.c.l.b16 %v52
  %v356 = vunpack.c.l.b16 %v53
  %v357 = vunpack.c.l.b16 %v54
  %v358 = vunpack.c.l.b16 %v55
  %v359 = vunpack.c.l.b16 %v56
  %v360 = vunpack.c.l.b16 %v57
  %v361 = vunpack.c.l.b16 %v58
  %v362 = vunpack.c.l.b16 %v59
  %v363 = vunpack.c.l.b16 %v60
  %v364 = vunpack.c.l.b16 %v61
  %v365 = vunpack.c.l.b16 %v62
  %v366 = vunpack.c.l.b16 %v63
  %v367 = vunpack.c.l.b16 %v64
  %v368 = vunpack.c.l.b16 %v65
  %v369 = vunpack.c.l.b16 %v66
  %v370 = vunpack.c.l.b16 %v67
  %v371 = vunpack.c.l.b16 %v68
  %v372 = vunpack.c.l.b16 %v69
  %v373 = vunpack.c.l.b16 %v70
  %v374 = vunpack.c.l.b16 %v71
  %v375 = vunpack.c.l.b16 %v72
  %v376 = vunpack.c.l.b16 %v73
  %v377 = vunpack.c.l.b16 %v74
  %v378 = vunpack.c.l.b16 %v75
  %v379 = vunpack.c.l.b16 %v76
  %v380 = vunpack.c.l.b16 %v77
  %v381 = vunpack.c.l.b16 %v78
  %v382 = vunpack.c.l.b16 %v79
  %v383 = vunpack.c.l.b16 %v80
  %v384 = vunpack.c.l.b16 %v81
  %v385 = vunpack.c.l.b16 %v82
  %v386 = vunpack.c.l.b16 %v83
  %v387 = vunpack.c.l.b16 %v84
  %v388 = vunpack.c.l.b16 %v85
  %v389 = vunpack.c.l.b16 %v86
  %v390 = vunpack.c.l.b16 %v87
  %v391 = vunpack.c.l.b16 %v88
  %v392 = vunpack.c.l.b16 %v89
  %v393 = vunpack.c.l.b16 %v90
  %v394 = vunpack.c.l.b16 %v91
  %v395 = vunpack.c.l.b16 %v92
  %v396 = vunpack.c.l.b16 %v93
  %v397 = vunpack.c.l.b16 %v94
  %v398 = vunpack.c.l.b16 %v95
  %v399 = vunpack.c.l.b16 %v96
  %v400 = vunpack.c.l.b16 %v97
  %v401 = vunpack.c.l.b16 %v98
  %v402 = vunpack.c.l.b16 %v99
  %v403 = vunpack.c.l.b16 %v100
  %v404 = vunpack.c.l.b16 %v101
  %v405 = vunpack.c.l.b16 %v102
  %v406 = vunpack.c.l.b16 %v103
  %v407 = vunpack.c.l.b16 %v104
  %v408 = vunpack.c.l.b16 %v105
  %v409 = vunpack.c.l.b16 %v106
  %v410 = vunpack.c.l.b16 %v107
  %v411 = vunpack.c.l.b16 %v108
  %v412 = vunpack.c.l.b16 %v109
  %v413 = vunpack.c.l.b16 %v110
  %v414 = vunpack.c.l.b16 %v111
  %v415 = vunpack.c.l.b16 %v112
  %v416 = vunpack.c.l.b16 %v113
  %v417 = vunpack.c.l.b16 %v114
  %v418 = vunpack.c.l.b16 %v115
  %v419 = vunpack.c.l.b16 %v116
  %v420 = vunpack.c.l.b16 %v117
  %v421 = vunpack.c.l.b16 %v118
  %v422 = vunpack.c.l.b16 %v119
  %v423 = vunpack.c.l.b16 %v120
  %v424 = vunpack.c.l.b16 %v121
  %v425 = vunpack.c.l.b16 %v122
  %v426 = vunpack.c.l.b16 %v123
  %v427 = vunpack.c.l.b16 %v124
  %v428 = vunpack.c.l.b16 %v125
  %v429 = vunpack.c.l.b16 %v126
  %v430 = vunpack.c.l.b16 %v127
  %v431 = vunpack.c.l.b16 %v128
  %v432 = vunpack.c.l.b16 %v129
  %v433 = vunpack.c.l.b16 %v130
  %v434 = vunpack.c.l.b16 %v131
  %v435 = vunpack.c.l.b16 %v132
  %v436 = vunpack.c.l.b16 %v133
  %v437 = vunpack.c.l.b16 %v134
  %v438 = vunpack.c.l.b16 %v135
  %v439 = vunpack.c.l.b16 %v136
  %v440 = vunpack.c.l.b16 %v137
  %v441 = vunpack.c.l.b16 %v138
  %v442 = vunpack.c.l.b16 %v139
  %v443 = vunpack.c.l.b16 %v140
  %v444 = vunpack.c.l.b16 %v141
  %v445 = vunpack.c.l.b16 %v142
  %v446 = vunpack.c.l.b16 %v143
  %v447 = vunpack.c.l.b16 %v144
  %v448 = vunpack.c.l.b16 %v145
  %v449 = vunpack.c.l.b16 %v146
  %v450 = vunpack.c.l.b16 %v147
  %v451 = vunpack.c.l.b16 %v148
  %v452 = vunpack.c.l.b16 %v149
  %v453 = vunpack.c.l.b16 %v150
  %v454 = vunpack.c.l.b16 %v151
  %v455 = vunpack.c.l.b16 %v152
  %v456 = vunpack.c.l.b16 %v153
  %v457 = vunpack.c.l.b16 %v154
  %v458 = vunpack.c.l.b16 %v155
  %v459 = vunpack.c.l.b16 %v156
  %v460 = vunpack.c.l.b16 %v157
  %v461 = vunpack.c.l.b16 %v158
  %v462 = vunpack.c.l.b16 %v159
  %v463 = vunpack.c.l.b16 %v160
  %v464 = vunpack.c.l.b16 %v161
  %v465 = vunpack.c.l.b16 %v162
  %v466 = vunpack.c.l.b16 %v163
  %v467 = vunpack.c.l.b16 %v164
  %v468 = vunpack.c.l.b16 %v165
  %v469 = vunpack.c.l.b16 %v166
  %v470 = vunpack.c.l.b16 %v167
  %v471 = vunpack.c.l.b16 %v168
  %v472 = vunpack.c.l.b16 %v169
  %v473 = vunpack.c.l.b16 %v170
  %v474 = vpack.c.b16 %v347, %v346
  %v475 = vpack.c.b16 %v349, %v348
  %v476 = vpack.c.b16 %v351, %v350
  %v477 = vpack.c.b16 %v353, %v352
  %v478 = vpack.c.b16 %v355, %v354
  %v479 = vpack.c.b16 %v357, %v356
  %v480 = vpack.c.b16 %v359, %v358
  %v481 = vpack.c.b16 %v361, %v360
  %v482 = vpack.c.b16 %v363, %v362
  %v483 = vpack.c.b16 %v365, %v364
  %v484 = vpack.c.b16 %v367, %v366
  %v485 = vpack.c.b16 %v369, %v368
  %v486 = vpack.c.b16 %v371, %v370
  %v487 = vpack.c.b16 %v373, %v372
  %v488 = vpack.c.b16 %v375, %v374
  %v489 = vpack.c.b16 %v377, %v376
  %v490 = vpack.c.b16 %v379, %v378
  %v491 = vpack.c.b16 %v381, %v380
  %v492 = vpack.c.b16 %v383, %v382
  %v493 = vpack.c.b16 %v385, %v384
  %v494 = vpack.c.b16 %v387, %v386
  %v495 = vpack.c.b16 %v389, %v388
  %v496 = vpack.c.b16 %v391, %v390
  %v497 = vpack.c.b16 %v393, %v392
  %v498 = vpack.c.b16 %v395, %v394
  %v499 = vpack.c.b16 %v397, %v396
  %v500 = vpack.c.b16 %v399, %v398
  %v501 = vpack.c.b16 %v401, %v400
  %v502 = vpack.c.b16 %v403, %v402
  %v503 = vpack.c.b16 %v405, %v404
  %v504 = vpack.c.b16 %v407, %v406
  %v505 = vpack.c.b16 %v409, %v408
  %v506 = vpack.c.b16 %v411, %v410
  %v507 = vpack.c.b16 %v413, %v412
  %v508 = vpack.c.b16 %v415, %v414
  %v509 = vpack.c.b16 %v417, %v416
  %v510 = vpack.c.b16 %v419, %v418
  %v511 = vpack.c.b16 %v421, %v420
  %v512 = vpack.c.b16 %v423, %v422
  %v513 = vpack.c.b16 %v425, %v424
  %v514 = vpack.c.b16 %v427, %v426
  %v515 = vpack.c.b16 %v429, %v428
  %v516 = vpack.c.b16 %v431, %v430
  %v517 = vpack.c.b16 %v433, %v432
  %v518 = vpack.c.b16 %v435, %v434
  %v519 = vpack.c.b16 %v437, %v436
  %v520 = vpack.c.b16 %v439, %v438
  %v521 = vpack.c.b16 %v441, %v440
  %v522 = vpack.c.b16 %v443, %v442
  %v523 = vpack.c.b16 %v445, %v444
  %v524 = vpack.c.b16 %v447, %v446
  %v525 = vpack.c.b16 %v449, %v448
  %v526 = vpack.c.b16 %v451, %v450
  %v527 = vpack.c.b16 %v453, %v452
  %v528 = vpack.c.b16 %v455, %v454
  %v529 = vpack.c.b16 %v457, %v456
  %v530 = vpack.c.b16 %v459, %v458
  %v531 = vpack.c.b16 %v461, %v460
  %v532 = vpack.c.b16 %v463, %v462
  %v533 = vpack.c.b16 %v465, %v464
  %v534 = vpack.c.b16 %v467, %v466
  %v535 = vpack.c.b16 %v469, %v468
  %v536 = vpack.c.b16 %v471, %v470
  %v537 = vpack.c.b16 %v473, %v472
  %602 = vmatprep.subr.bf16.mxu0 0
  %603 = vmatpush1.bf16.msra.mxu0 %v474
  %604 = vmatprep.subr.bf16.mxu0 0
  %605 = vmatpush1.bf16.msra.mxu0 %v475
  %606 = vmatprep.subr.bf16.mxu0 0
  %607 = vmatpush1.bf16.msra.mxu0 %v476
  %608 = vmatprep.subr.bf16.mxu0 0
  %609 = vmatpush1.bf16.msra.mxu0 %v477
  %610 = vmatprep.subr.bf16.mxu0 0
  %611 = vmatpush1.bf16.msra.mxu0 %v478
  %612 = vmatprep.subr.bf16.mxu0 0
  %613 = vmatpush1.bf16.msra.mxu0 %v479
  %614 = vmatprep.subr.bf16.mxu0 0
  %615 = vmatpush1.bf16.msra.mxu0 %v480
  %616 = vmatprep.subr.bf16.mxu0 0
  %617 = vmatpush1.bf16.msra.mxu0 %v481
  %618 = vmatprep.subr.bf16.mxu0 0
  %619 = vmatpush1.bf16.msra.mxu0 %v482
  %620 = vmatprep.subr.bf16.mxu0 0
  %621 = vmatpush1.bf16.msra.mxu0 %v483
  %622 = vmatprep.subr.bf16.mxu0 0
  %623 = vmatpush1.bf16.msra.mxu0 %v484
  %624 = vmatprep.subr.bf16.mxu0 0
  %625 = vmatpush1.bf16.msra.mxu0 %v485
  %626 = vmatprep.subr.bf16.mxu0 0
  %627 = vmatpush1.bf16.msra.mxu0 %v486
  %628 = vmatprep.subr.bf16.mxu0 0
  %629 = vmatpush1.bf16.msra.mxu0 %v487
  %630 = vmatprep.subr.bf16.mxu0 0
  %631 = vmatpush1.bf16.msra.mxu0 %v488
  %632 = vmatprep.subr.bf16.mxu0 0
  %633 = vmatpush1.bf16.msra.mxu0 %v489
  %634 = vmatprep.mubr.bf16.mxu0 %v203
  %635 = vmatmul.mubr.bf16.gmra.mrb[0].mxu0 %v202
  %v636 = vpop.f32.mrb[0].mxu0
  %v637 = vadd.f32 %v176, %v636
  %v638 = vpop.f32.mrb[0].mxu0
  %v639 = vpop.f32.mrb[0].mxu0
  %v640 = vadd.f32 %v176, %v639
  %v641 = vpop.f32.mrb[0].mxu0
  %642 = vdwg.mxu0
  %643 = vmatprep.subr.bf16.mxu0 0
  %644 = vmatpush1.bf16.msra.mxu0 %v490
  %645 = vmatprep.subr.bf16.mxu0 0
  %646 = vmatpush1.bf16.msra.mxu0 %v491
  %647 = vmatprep.subr.bf16.mxu0 0
  %648 = vmatpush1.bf16.msra.mxu0 %v492
  %649 = vmatprep.subr.bf16.mxu0 0
  %650 = vmatpush1.bf16.msra.mxu0 %v493
  %651 = vmatprep.subr.bf16.mxu0 0
  %652 = vmatpush1.bf16.msra.mxu0 %v494
  %653 = vmatprep.subr.bf16.mxu0 0
  %654 = vmatpush1.bf16.msra.mxu0 %v495
  %655 = vmatprep.subr.bf16.mxu0 0
  %656 = vmatpush1.bf16.msra.mxu0 %v496
  %657 = vmatprep.subr.bf16.mxu0 0
  %658 = vmatpush1.bf16.msra.mxu0 %v497
  %659 = vmatprep.subr.bf16.mxu0 0
  %660 = vmatpush1.bf16.msra.mxu0 %v498
  %661 = vmatprep.subr.bf16.mxu0 0
  %662 = vmatpush1.bf16.msra.mxu0 %v499
  %663 = vmatprep.subr.bf16.mxu0 0
  %664 = vmatpush1.bf16.msra.mxu0 %v500
  %665 = vmatprep.subr.bf16.mxu0 0
  %666 = vmatpush1.bf16.msra.mxu0 %v501
  %667 = vmatprep.subr.bf16.mxu0 0
  %668 = vmatpush1.bf16.msra.mxu0 %v502
  %669 = vmatprep.subr.bf16.mxu0 0
  %670 = vmatpush1.bf16.msra.mxu0 %v503
  %671 = vmatprep.subr.bf16.mxu0 0
  %672 = vmatpush1.bf16.msra.mxu0 %v504
  %673 = vmatprep.subr.bf16.mxu0 0
  %674 = vmatpush1.bf16.msra.mxu0 %v505
  %675 = vmatprep.mubr.bf16.mxu0 %v205
  %676 = vmatmul.mubr.bf16.gmra.mrb[0].mxu0 %v204
  %v677 = vpop.f32.mrb[0].mxu0
  %v678 = vadd.f32 %v637, %v677
  %v679 = vpop.f32.mrb[0].mxu0
  %v680 = vpop.f32.mrb[0].mxu0
  %v681 = vadd.f32 %v640, %v680
  %v682 = vpop.f32.mrb[0].mxu0
  %683 = vdwg.mxu0
  %684 = vmatprep.subr.bf16.mxu0 0
  %685 = vmatpush1.bf16.msra.mxu0 %v506
  %686 = vmatprep.subr.bf16.mxu0 0
  %687 = vmatpush1.bf16.msra.mxu0 %v507
  %688 = vmatprep.subr.bf16.mxu0 0
  %689 = vmatpush1.bf16.msra.mxu0 %v508
  %690 = vmatprep.subr.bf16.mxu0 0
  %691 = vmatpush1.bf16.msra.mxu0 %v509
  %692 = vmatprep.subr.bf16.mxu0 0
  %693 = vmatpush1.bf16.msra.mxu0 %v510
  %694 = vmatprep.subr.bf16.mxu0 0
  %695 = vmatpush1.bf16.msra.mxu0 %v511
  %696 = vmatprep.subr.bf16.mxu0 0
  %697 = vmatpush1.bf16.msra.mxu0 %v512
  %698 = vmatprep.subr.bf16.mxu0 0
  %699 = vmatpush1.bf16.msra.mxu0 %v513
  %700 = vmatprep.subr.bf16.mxu0 0
  %701 = vmatpush1.bf16.msra.mxu0 %v514
  %702 = vmatprep.subr.bf16.mxu0 0
  %703 = vmatpush1.bf16.msra.mxu0 %v515
  %704 = vmatprep.subr.bf16.mxu0 0
  %705 = vmatpush1.bf16.msra.mxu0 %v516
  %706 = vmatprep.subr.bf16.mxu0 0
  %707 = vmatpush1.bf16.msra.mxu0 %v517
  %708 = vmatprep.subr.bf16.mxu0 0
  %709 = vmatpush1.bf16.msra.mxu0 %v518
  %710 = vmatprep.subr.bf16.mxu0 0
  %711 = vmatpush1.bf16.msra.mxu0 %v519
  %712 = vmatprep.subr.bf16.mxu0 0
  %713 = vmatpush1.bf16.msra.mxu0 %v520
  %714 = vmatprep.subr.bf16.mxu0 0
  %715 = vmatpush1.bf16.msra.mxu0 %v521
  %716 = vmatprep.mubr.bf16.mxu0 %v207
  %717 = vmatmul.mubr.bf16.gmra.mrb[0].mxu0 %v206
  %v718 = vpop.f32.mrb[0].mxu0
  %v719 = vadd.f32 %v678, %v718
  %v720 = vpop.f32.mrb[0].mxu0
  %v721 = vpop.f32.mrb[0].mxu0
  %v722 = vadd.f32 %v681, %v721
  %v723 = vpop.f32.mrb[0].mxu0
  %724 = vdwg.mxu0
  %725 = vmatprep.subr.bf16.mxu0 0
  %726 = vmatpush1.bf16.msra.mxu0 %v522
  %727 = vmatprep.subr.bf16.mxu0 0
  %728 = vmatpush1.bf16.msra.mxu0 %v523
  %729 = vmatprep.subr.bf16.mxu0 0
  %730 = vmatpush1.bf16.msra.mxu0 %v524
  %731 = vmatprep.subr.bf16.mxu0 0
  %732 = vmatpush1.bf16.msra.mxu0 %v525
  %733 = vmatprep.subr.bf16.mxu0 0
  %734 = vmatpush1.bf16.msra.mxu0 %v526
  %735 = vmatprep.subr.bf16.mxu0 0
  %736 = vmatpush1.bf16.msra.mxu0 %v527
  %737 = vmatprep.subr.bf16.mxu0 0
  %738 = vmatpush1.bf16.msra.mxu0 %v528
  %739 = vmatprep.subr.bf16.mxu0 0
  %740 = vmatpush1.bf16.msra.mxu0 %v529
  %741 = vmatprep.subr.bf16.mxu0 0
  %742 = vmatpush1.bf16.msra.mxu0 %v530
  %743 = vmatprep.subr.bf16.mxu0 0
  %744 = vmatpush1.bf16.msra.mxu0 %v531
  %745 = vmatprep.subr.bf16.mxu0 0
  %746 = vmatpush1.bf16.msra.mxu0 %v532
  %747 = vmatprep.subr.bf16.mxu0 0
  %748 = vmatpush1.bf16.msra.mxu0 %v533
  %749 = vmatprep.subr.bf16.mxu0 0
  %750 = vmatpush1.bf16.msra.mxu0 %v534
  %751 = vmatprep.subr.bf16.mxu0 0
  %752 = vmatpush1.bf16.msra.mxu0 %v535
  %753 = vmatprep.subr.bf16.mxu0 0
  %754 = vmatpush1.bf16.msra.mxu0 %v536
  %755 = vmatprep.subr.bf16.mxu0 0
  %756 = vmatpush1.bf16.msra.mxu0 %v537
  %757 = vmatprep.mubr.bf16.mxu0 %v209
  %758 = vmatmul.mubr.bf16.gmra.mrb[0].mxu0 %v208
  %v759 = vpop.f32.mrb[0].mxu0
  %v760 = vadd.f32 %v719, %v759
  %v761 = vpop.f32.mrb[0].mxu0
  %v762 = vpop.f32.mrb[0].mxu0
  %v763 = vadd.f32 %v722, %v762
  %v764 = vpop.f32.mrb[0].mxu0
  %765 = vdwg.mxu0
  %v766 = vmax.f32 %v760, 0.0
  %v767 = vmax.f32 %v763, 0.0
  %v768 = vpack.c.bf16 %v767, %v766
  %v769 = vld [vmem:[%s3] sm:$0xf]
  %v770 = vld [vmem:[%s3 + $0x4] sm:$0xf]
  %v771 = vld [vmem:[%s3 + $0x8] sm:$0xf]
  %v772 = vld [vmem:[%s3 + $0xc] sm:$0xf]
  %v773 = vld [vmem:[%s4] sm:$0x1]
  %v775 = vlaneseq
  %v776 = vshrl.u32 %v775, 7
  %v777 = vsub.s32 0, %v776
  %v778 = vrot.slane %v773, %v777
  %v784 = vunpack.c.l.b16 %v769
  %v785 = vunpack.c.l.b16 %v770
  %v786 = vunpack.c.l.b16 %v771
  %v787 = vunpack.c.l.b16 %v772
  %v788 = vpack.c.b16 %v785, %v784
  %v789 = vpack.c.b16 %v787, %v786
  %vm792 = vcmask 261120
  %v794 = vsel %vm792, %v768, 0
  %796 = vmatprep.subr.bf16.mxu0 0
  %797 = vmatpush1.bf16.msra.mxu0 %v788
  %798 = vmatprep.subr.bf16.mxu0 0
  %799 = vmatpush1.bf16.msra.mxu0 %v789
  %800 = vmatprep.subr.bf16.mxu0 0
  %801 = vmatpush1.bf16.msra.mxu0 0
  %802 = vmatprep.subr.bf16.mxu0 0
  %803 = vmatpush1.bf16.msra.mxu0 0
  %804 = vmatprep.subr.bf16.mxu0 0
  %805 = vmatpush1.bf16.msra.mxu0 0
  %806 = vmatprep.subr.bf16.mxu0 0
  %807 = vmatpush1.bf16.msra.mxu0 0
  %808 = vmatprep.subr.bf16.mxu0 0
  %809 = vmatpush1.bf16.msra.mxu0 0
  %810 = vmatprep.subr.bf16.mxu0 0
  %811 = vmatpush1.bf16.msra.mxu0 0
  %812 = vmatprep.subr.bf16.mxu0 0
  %813 = vmatpush1.bf16.msra.mxu0 0
  %814 = vmatprep.subr.bf16.mxu0 0
  %815 = vmatpush1.bf16.msra.mxu0 0
  %816 = vmatprep.subr.bf16.mxu0 0
  %817 = vmatpush1.bf16.msra.mxu0 0
  %818 = vmatprep.subr.bf16.mxu0 0
  %819 = vmatpush1.bf16.msra.mxu0 0
  %820 = vmatprep.subr.bf16.mxu0 0
  %821 = vmatpush1.bf16.msra.mxu0 0
  %822 = vmatprep.subr.bf16.mxu0 0
  %823 = vmatpush1.bf16.msra.mxu0 0
  %824 = vmatprep.subr.bf16.mxu0 0
  %825 = vmatpush1.bf16.msra.mxu0 0
  %826 = vmatprep.subr.bf16.mxu0 0
  %827 = vmatpush1.bf16.msra.mxu0 0
  %828 = vmatprep.mubr.bf16.mxu0 0
  %829 = vmatmul.mubr.bf16.gmra.mrb[0].mxu0 %v794
  %v830 = vpop.f32.mrb[0].mxu0
  %v831 = vadd.f32 %v778, %v830
  %v832 = vpop.f32.mrb[0].mxu0
  %v833 = vpop.f32.mrb[0].mxu0
  %v834 = vadd.f32 %v778, %v833
  %v835 = vpop.f32.mrb[0].mxu0
  %836 = vdwg.mxu0
  %837 = vst [vmem:[%s10] sm:$0xff] %v831
  %838 = vst [vmem:[%s10 + $0x8] sm:$0xff] %v834
  %v839 = vld [vmem:[%s6] sm:$0x1]
  %v841 = vlaneseq
  %v842 = vshrl.u32 %v841, 7
  %v843 = vsub.s32 0, %v842
  %v844 = vrot.slane %v839, %v843
  %v846 = vld [vmem:[%s5] sm:$0x1]
  %848 = vset.pattern.permute.xlu0 0
  %849 = vperm.xlu0 %848, %v831
  %v850 = vpop.permute.xlu0 %849
  %853 = vset.pattern.permute.xlu0 0
  %854 = vperm.xlu0 %853, %v834
  %v855 = vpop.permute.xlu0 %854
  %v857 = vlaneseq
  %v858 = vshrl.u32 %v857, 7
  %v859 = vsub.s32 0, %v858
  %v860 = vrot.slane %v846, %v859
  %v861 = vmul.f32 %v850, %v860
  %v862 = vmul.f32 %v855, %v860
  %v863 = vadd.f32 %v844, %v861
  %v864 = vadd.f32 %v844, %v862
  %v865 = vld [vmem:[%s5 + $0x1] sm:$0x1]
  %866 = vset.pattern.permute.xlu0 1
  %867 = vperm.xlu0 %866, %v831
  %v868 = vpop.permute.xlu0 %867
  %870 = vset.pattern.permute.xlu0 1
  %871 = vperm.xlu0 %870, %v834
  %v872 = vpop.permute.xlu0 %871
  %v874 = vlaneseq
  %v875 = vshrl.u32 %v874, 7
  %v876 = vsub.s32 0, %v875
  %v877 = vrot.slane %v865, %v876
  %v878 = vmul.f32 %v868, %v877
  %v879 = vmul.f32 %v872, %v877
  %v880 = vadd.f32 %v863, %v878
  %v881 = vadd.f32 %v864, %v879
  %v882 = vmax.f32 %v880, 0.0
  %v883 = vmax.f32 %v881, 0.0
  %v884 = vpack.c.bf16 %v883, %v882
  %v885 = vld [vmem:[%s7] sm:$0xff]
  %v886 = vld [vmem:[%s7 + $0x8] sm:$0xff]
  %v887 = vld [vmem:[%s7 + $0x10] sm:$0xff]
  %v888 = vld [vmem:[%s7 + $0x18] sm:$0xff]
  %v889 = vld [vmem:[%s7 + $0x20] sm:$0xff]
  %v890 = vld [vmem:[%s7 + $0x28] sm:$0xff]
  %v891 = vld [vmem:[%s7 + $0x30] sm:$0xff]
  %v892 = vld [vmem:[%s7 + $0x38] sm:$0xff]
  %v893 = vld [vmem:[%s7 + $0x40] sm:$0xff]
  %v894 = vld [vmem:[%s7 + $0x48] sm:$0xff]
  %v895 = vld [vmem:[%s7 + $0x50] sm:$0xff]
  %v896 = vld [vmem:[%s7 + $0x58] sm:$0xff]
  %v897 = vld [vmem:[%s7 + $0x60] sm:$0xff]
  %v898 = vld [vmem:[%s7 + $0x68] sm:$0xff]
  %v899 = vld [vmem:[%s7 + $0x70] sm:$0xff]
  %v900 = vld [vmem:[%s7 + $0x78] sm:$0xff]
  %v901 = vld [vmem:[%s8] sm:$0xff]
  %v903 = vlaneseq
  %v904 = vshrl.u32 %v903, 7
  %v905 = vsub.s32 0, %v904
  %v906 = vrot.slane %v901, %v905
  %v907 = vlaneseq
  %v908 = vshrl.u32 %v907, 7
  %v909 = vsub.s32 1, %v908
  %v910 = vrot.slane %v901, %v909
  %v911 = vlaneseq
  %v912 = vshrl.u32 %v911, 7
  %v913 = vsub.s32 2, %v912
  %v914 = vrot.slane %v901, %v913
  %v915 = vlaneseq
  %v916 = vshrl.u32 %v915, 7
  %v917 = vsub.s32 3, %v916
  %v918 = vrot.slane %v901, %v917
  %v919 = vlaneseq
  %v920 = vshrl.u32 %v919, 7
  %v921 = vsub.s32 4, %v920
  %v922 = vrot.slane %v901, %v921
  %v923 = vlaneseq
  %v924 = vshrl.u32 %v923, 7
  %v925 = vsub.s32 5, %v924
  %v926 = vrot.slane %v901, %v925
  %v927 = vlaneseq
  %v928 = vshrl.u32 %v927, 7
  %v929 = vsub.s32 6, %v928
  %v930 = vrot.slane %v901, %v929
  %v931 = vlaneseq
  %v932 = vshrl.u32 %v931, 7
  %v933 = vsub.s32 7, %v932
  %v934 = vrot.slane %v901, %v933
  %v959 = vunpack.c.l.b16 %v885
  %v960 = vunpack.c.h.b16 %v885
  %v961 = vunpack.c.l.b16 %v886
  %v962 = vunpack.c.h.b16 %v886
  %v963 = vunpack.c.l.b16 %v887
  %v964 = vunpack.c.h.b16 %v887
  %v965 = vunpack.c.l.b16 %v888
  %v966 = vunpack.c.h.b16 %v888
  %v967 = vunpack.c.l.b16 %v889
  %v968 = vunpack.c.h.b16 %v889
  %v969 = vunpack.c.l.b16 %v890
  %v970 = vunpack.c.h.b16 %v890
  %v971 = vunpack.c.l.b16 %v891
  %v972 = vunpack.c.h.b16 %v891
  %v973 = vunpack.c.l.b16 %v892
  %v974 = vunpack.c.h.b16 %v892
  %v975 = vunpack.c.l.b16 %v893
  %v976 = vunpack.c.h.b16 %v893
  %v977 = vunpack.c.l.b16 %v894
  %v978 = vunpack.c.h.b16 %v894
  %v979 = vunpack.c.l.b16 %v895
  %v980 = vunpack.c.h.b16 %v895
  %v981 = vunpack.c.l.b16 %v896
  %v982 = vunpack.c.h.b16 %v896
  %v983 = vunpack.c.l.b16 %v897
  %v984 = vunpack.c.h.b16 %v897
  %v985 = vunpack.c.l.b16 %v898
  %v986 = vunpack.c.h.b16 %v898
  %v987 = vunpack.c.l.b16 %v899
  %v988 = vunpack.c.h.b16 %v899
  %v989 = vunpack.c.l.b16 %v900
  %v990 = vunpack.c.h.b16 %v900
  %v991 = vpack.c.b16 %v967, %v959
  %v992 = vpack.c.b16 %v968, %v960
  %v993 = vpack.c.b16 %v969, %v961
  %v994 = vpack.c.b16 %v970, %v962
  %v995 = vpack.c.b16 %v971, %v963
  %v996 = vpack.c.b16 %v972, %v964
  %v997 = vpack.c.b16 %v973, %v965
  %v998 = vpack.c.b16 %v974, %v966
  %v999 = vpack.c.b16 %v983, %v975
  %v1000 = vpack.c.b16 %v984, %v976
  %v1001 = vpack.c.b16 %v985, %v977
  %v1002 = vpack.c.b16 %v986, %v978
  %v1003 = vpack.c.b16 %v987, %v979
  %v1004 = vpack.c.b16 %v988, %v980
  %v1005 = vpack.c.b16 %v989, %v981
  %v1006 = vpack.c.b16 %v990, %v982
  %v1024 = vsel %vm792, %v884, 0
  %1026 = vmatprep.subr.bf16.mxu0 %v992
  %1027 = vmatpush1.bf16.msra.mxu0 %v991
  %1028 = vmatprep.subr.bf16.mxu0 %v1000
  %1029 = vmatpush1.bf16.msra.mxu0 %v999
  %1030 = vmatprep.subr.bf16.mxu0 0
  %1031 = vmatpush1.bf16.msra.mxu0 0
  %1032 = vmatprep.subr.bf16.mxu0 0
  %1033 = vmatpush1.bf16.msra.mxu0 0
  %1034 = vmatprep.subr.bf16.mxu0 0
  %1035 = vmatpush1.bf16.msra.mxu0 0
  %1036 = vmatprep.subr.bf16.mxu0 0
  %1037 = vmatpush1.bf16.msra.mxu0 0
  %1038 = vmatprep.subr.bf16.mxu0 0
  %1039 = vmatpush1.bf16.msra.mxu0 0
  %1040 = vmatprep.subr.bf16.mxu0 0
  %1041 = vmatpush1.bf16.msra.mxu0 0
  %1042 = vmatprep.subr.bf16.mxu0 0
  %1043 = vmatpush1.bf16.msra.mxu0 0
  %1044 = vmatprep.subr.bf16.mxu0 0
  %1045 = vmatpush1.bf16.msra.mxu0 0
  %1046 = vmatprep.subr.bf16.mxu0 0
  %1047 = vmatpush1.bf16.msra.mxu0 0
  %1048 = vmatprep.subr.bf16.mxu0 0
  %1049 = vmatpush1.bf16.msra.mxu0 0
  %1050 = vmatprep.subr.bf16.mxu0 0
  %1051 = vmatpush1.bf16.msra.mxu0 0
  %1052 = vmatprep.subr.bf16.mxu0 0
  %1053 = vmatpush1.bf16.msra.mxu0 0
  %1054 = vmatprep.subr.bf16.mxu0 0
  %1055 = vmatpush1.bf16.msra.mxu0 0
  %1056 = vmatprep.subr.bf16.mxu0 0
  %1057 = vmatpush1.bf16.msra.mxu0 0
  %1058 = vmatprep.mubr.bf16.mxu0 0
  %1059 = vmatmul.mubr.bf16.gmra.mrb[0].mxu0 %v1024
  %v1060 = vpop.f32.mrb[0].mxu0
  %v1061 = vadd.f32 %v906, %v1060
  %v1062 = vpop.f32.mrb[0].mxu0
  %v1063 = vadd.f32 %v910, %v1062
  %v1064 = vpop.f32.mrb[0].mxu0
  %v1065 = vadd.f32 %v906, %v1064
  %v1066 = vpop.f32.mrb[0].mxu0
  %v1067 = vadd.f32 %v910, %v1066
  %1068 = vdwg.mxu0
  %1069 = vmatprep.subr.bf16.mxu0 %v994
  %1070 = vmatpush1.bf16.msra.mxu0 %v993
  %1071 = vmatprep.subr.bf16.mxu0 %v1002
  %1072 = vmatpush1.bf16.msra.mxu0 %v1001
  %1073 = vmatprep.subr.bf16.mxu0 0
  %1074 = vmatpush1.bf16.msra.mxu0 0
  %1075 = vmatprep.subr.bf16.mxu0 0
  %1076 = vmatpush1.bf16.msra.mxu0 0
  %1077 = vmatprep.subr.bf16.mxu0 0
  %1078 = vmatpush1.bf16.msra.mxu0 0
  %1079 = vmatprep.subr.bf16.mxu0 0
  %1080 = vmatpush1.bf16.msra.mxu0 0
  %1081 = vmatprep.subr.bf16.mxu0 0
  %1082 = vmatpush1.bf16.msra.mxu0 0
  %1083 = vmatprep.subr.bf16.mxu0 0
  %1084 = vmatpush1.bf16.msra.mxu0 0
  %1085 = vmatprep.subr.bf16.mxu0 0
  %1086 = vmatpush1.bf16.msra.mxu0 0
  %1087 = vmatprep.subr.bf16.mxu0 0
  %1088 = vmatpush1.bf16.msra.mxu0 0
  %1089 = vmatprep.subr.bf16.mxu0 0
  %1090 = vmatpush1.bf16.msra.mxu0 0
  %1091 = vmatprep.subr.bf16.mxu0 0
  %1092 = vmatpush1.bf16.msra.mxu0 0
  %1093 = vmatprep.subr.bf16.mxu0 0
  %1094 = vmatpush1.bf16.msra.mxu0 0
  %1095 = vmatprep.subr.bf16.mxu0 0
  %1096 = vmatpush1.bf16.msra.mxu0 0
  %1097 = vmatprep.subr.bf16.mxu0 0
  %1098 = vmatpush1.bf16.msra.mxu0 0
  %1099 = vmatprep.subr.bf16.mxu0 0
  %1100 = vmatpush1.bf16.msra.mxu0 0
  %1101 = vmatprep.mubr.bf16.mxu0 0
  %1102 = vmatmul.mubr.bf16.gmra.mrb[0].mxu0 %v1024
  %v1103 = vpop.f32.mrb[0].mxu0
  %v1104 = vadd.f32 %v914, %v1103
  %v1105 = vpop.f32.mrb[0].mxu0
  %v1106 = vadd.f32 %v918, %v1105
  %v1107 = vpop.f32.mrb[0].mxu0
  %v1108 = vadd.f32 %v914, %v1107
  %v1109 = vpop.f32.mrb[0].mxu0
  %v1110 = vadd.f32 %v918, %v1109
  %1111 = vdwg.mxu0
  %1112 = vmatprep.subr.bf16.mxu0 %v996
  %1113 = vmatpush1.bf16.msra.mxu0 %v995
  %1114 = vmatprep.subr.bf16.mxu0 %v1004
  %1115 = vmatpush1.bf16.msra.mxu0 %v1003
  %1116 = vmatprep.subr.bf16.mxu0 0
  %1117 = vmatpush1.bf16.msra.mxu0 0
  %1118 = vmatprep.subr.bf16.mxu0 0
  %1119 = vmatpush1.bf16.msra.mxu0 0
  %1120 = vmatprep.subr.bf16.mxu0 0
  %1121 = vmatpush1.bf16.msra.mxu0 0
  %1122 = vmatprep.subr.bf16.mxu0 0
  %1123 = vmatpush1.bf16.msra.mxu0 0
  %1124 = vmatprep.subr.bf16.mxu0 0
  %1125 = vmatpush1.bf16.msra.mxu0 0
  %1126 = vmatprep.subr.bf16.mxu0 0
  %1127 = vmatpush1.bf16.msra.mxu0 0
  %1128 = vmatprep.subr.bf16.mxu0 0
  %1129 = vmatpush1.bf16.msra.mxu0 0
  %1130 = vmatprep.subr.bf16.mxu0 0
  %1131 = vmatpush1.bf16.msra.mxu0 0
  %1132 = vmatprep.subr.bf16.mxu0 0
  %1133 = vmatpush1.bf16.msra.mxu0 0
  %1134 = vmatprep.subr.bf16.mxu0 0
  %1135 = vmatpush1.bf16.msra.mxu0 0
  %1136 = vmatprep.subr.bf16.mxu0 0
  %1137 = vmatpush1.bf16.msra.mxu0 0
  %1138 = vmatprep.subr.bf16.mxu0 0
  %1139 = vmatpush1.bf16.msra.mxu0 0
  %1140 = vmatprep.subr.bf16.mxu0 0
  %1141 = vmatpush1.bf16.msra.mxu0 0
  %1142 = vmatprep.subr.bf16.mxu0 0
  %1143 = vmatpush1.bf16.msra.mxu0 0
  %1144 = vmatprep.mubr.bf16.mxu0 0
  %1145 = vmatmul.mubr.bf16.gmra.mrb[0].mxu0 %v1024
  %v1146 = vpop.f32.mrb[0].mxu0
  %v1147 = vadd.f32 %v922, %v1146
  %v1148 = vpop.f32.mrb[0].mxu0
  %v1149 = vadd.f32 %v926, %v1148
  %v1150 = vpop.f32.mrb[0].mxu0
  %v1151 = vadd.f32 %v922, %v1150
  %v1152 = vpop.f32.mrb[0].mxu0
  %v1153 = vadd.f32 %v926, %v1152
  %1154 = vdwg.mxu0
  %1155 = vmatprep.subr.bf16.mxu0 %v998
  %1156 = vmatpush1.bf16.msra.mxu0 %v997
  %1157 = vmatprep.subr.bf16.mxu0 %v1006
  %1158 = vmatpush1.bf16.msra.mxu0 %v1005
  %1159 = vmatprep.subr.bf16.mxu0 0
  %1160 = vmatpush1.bf16.msra.mxu0 0
  %1161 = vmatprep.subr.bf16.mxu0 0
  %1162 = vmatpush1.bf16.msra.mxu0 0
  %1163 = vmatprep.subr.bf16.mxu0 0
  %1164 = vmatpush1.bf16.msra.mxu0 0
  %1165 = vmatprep.subr.bf16.mxu0 0
  %1166 = vmatpush1.bf16.msra.mxu0 0
  %1167 = vmatprep.subr.bf16.mxu0 0
  %1168 = vmatpush1.bf16.msra.mxu0 0
  %1169 = vmatprep.subr.bf16.mxu0 0
  %1170 = vmatpush1.bf16.msra.mxu0 0
  %1171 = vmatprep.subr.bf16.mxu0 0
  %1172 = vmatpush1.bf16.msra.mxu0 0
  %1173 = vmatprep.subr.bf16.mxu0 0
  %1174 = vmatpush1.bf16.msra.mxu0 0
  %1175 = vmatprep.subr.bf16.mxu0 0
  %1176 = vmatpush1.bf16.msra.mxu0 0
  %1177 = vmatprep.subr.bf16.mxu0 0
  %1178 = vmatpush1.bf16.msra.mxu0 0
  %1179 = vmatprep.subr.bf16.mxu0 0
  %1180 = vmatpush1.bf16.msra.mxu0 0
  %1181 = vmatprep.subr.bf16.mxu0 0
  %1182 = vmatpush1.bf16.msra.mxu0 0
  %1183 = vmatprep.subr.bf16.mxu0 0
  %1184 = vmatpush1.bf16.msra.mxu0 0
  %1185 = vmatprep.subr.bf16.mxu0 0
  %1186 = vmatpush1.bf16.msra.mxu0 0
  %1187 = vmatprep.mubr.bf16.mxu0 0
  %1188 = vmatmul.mubr.bf16.gmra.mrb[0].mxu0 %v1024
  %v1189 = vpop.f32.mrb[0].mxu0
  %v1190 = vadd.f32 %v930, %v1189
  %v1191 = vpop.f32.mrb[0].mxu0
  %v1192 = vadd.f32 %v934, %v1191
  %v1193 = vpop.f32.mrb[0].mxu0
  %v1194 = vadd.f32 %v930, %v1193
  %v1195 = vpop.f32.mrb[0].mxu0
  %v1196 = vadd.f32 %v934, %v1195
  %1197 = vdwg.mxu0
  %v1198 = vmax.f32 %v1061, -30.0
  %v1199 = vmax.f32 %v1063, -30.0
  %v1200 = vmax.f32 %v1104, -30.0
  %v1201 = vmax.f32 %v1106, -30.0
  %v1202 = vmax.f32 %v1147, -30.0
  %v1203 = vmax.f32 %v1149, -30.0
  %v1204 = vmax.f32 %v1190, -30.0
  %v1205 = vmax.f32 %v1192, -30.0
  %v1206 = vmax.f32 %v1065, -30.0
  %v1207 = vmax.f32 %v1067, -30.0
  %v1208 = vmax.f32 %v1108, -30.0
  %v1209 = vmax.f32 %v1110, -30.0
  %v1210 = vmax.f32 %v1151, -30.0
  %v1211 = vmax.f32 %v1153, -30.0
  %v1212 = vmax.f32 %v1194, -30.0
  %v1213 = vmax.f32 %v1196, -30.0
  %v1214 = vmin.f32 %v1198, 30.0
  %v1215 = vmin.f32 %v1199, 30.0
  %v1216 = vmin.f32 %v1200, 30.0
  %v1217 = vmin.f32 %v1201, 30.0
  %v1218 = vmin.f32 %v1202, 30.0
  %v1219 = vmin.f32 %v1203, 30.0
  %v1220 = vmin.f32 %v1204, 30.0
  %v1221 = vmin.f32 %v1205, 30.0
  %v1222 = vmin.f32 %v1206, 30.0
  %v1223 = vmin.f32 %v1207, 30.0
  %v1224 = vmin.f32 %v1208, 30.0
  %v1225 = vmin.f32 %v1209, 30.0
  %v1226 = vmin.f32 %v1210, 30.0
  %v1227 = vmin.f32 %v1211, 30.0
  %v1228 = vmin.f32 %v1212, 30.0
  %v1229 = vmin.f32 %v1213, 30.0
  %v1230 = vsub.f32 0.0, %v1214
  %v1231 = vsub.f32 0.0, %v1215
  %v1232 = vsub.f32 0.0, %v1216
  %v1233 = vsub.f32 0.0, %v1217
  %v1234 = vsub.f32 0.0, %v1218
  %v1235 = vsub.f32 0.0, %v1219
  %v1236 = vsub.f32 0.0, %v1220
  %v1237 = vsub.f32 0.0, %v1221
  %v1238 = vsub.f32 0.0, %v1222
  %v1239 = vsub.f32 0.0, %v1223
  %v1240 = vsub.f32 0.0, %v1224
  %v1241 = vsub.f32 0.0, %v1225
  %v1242 = vsub.f32 0.0, %v1226
  %v1243 = vsub.f32 0.0, %v1227
  %v1244 = vsub.f32 0.0, %v1228
  %v1245 = vsub.f32 0.0, %v1229
  %v1246 = vmul.f32 %v1230, 1.442695
  %v1247 = vpow.pop %v1246
  %v1248 = vmul.f32 %v1231, 1.442695
  %v1249 = vpow.pop %v1248
  %v1250 = vmul.f32 %v1232, 1.442695
  %v1251 = vpow.pop %v1250
  %v1252 = vmul.f32 %v1233, 1.442695
  %v1253 = vpow.pop %v1252
  %v1254 = vmul.f32 %v1234, 1.442695
  %v1255 = vpow.pop %v1254
  %v1256 = vmul.f32 %v1235, 1.442695
  %v1257 = vpow.pop %v1256
  %v1258 = vmul.f32 %v1236, 1.442695
  %v1259 = vpow.pop %v1258
  %v1260 = vmul.f32 %v1237, 1.442695
  %v1261 = vpow.pop %v1260
  %v1262 = vmul.f32 %v1238, 1.442695
  %v1263 = vpow.pop %v1262
  %v1264 = vmul.f32 %v1239, 1.442695
  %v1265 = vpow.pop %v1264
  %v1266 = vmul.f32 %v1240, 1.442695
  %v1267 = vpow.pop %v1266
  %v1268 = vmul.f32 %v1241, 1.442695
  %v1269 = vpow.pop %v1268
  %v1270 = vmul.f32 %v1242, 1.442695
  %v1271 = vpow.pop %v1270
  %v1272 = vmul.f32 %v1243, 1.442695
  %v1273 = vpow.pop %v1272
  %v1274 = vmul.f32 %v1244, 1.442695
  %v1275 = vpow.pop %v1274
  %v1276 = vmul.f32 %v1245, 1.442695
  %v1277 = vpow.pop %v1276
  %v1278 = vadd.f32 %v1247, 1.0
  %v1279 = vadd.f32 %v1249, 1.0
  %v1280 = vadd.f32 %v1251, 1.0
  %v1281 = vadd.f32 %v1253, 1.0
  %v1282 = vadd.f32 %v1255, 1.0
  %v1283 = vadd.f32 %v1257, 1.0
  %v1284 = vadd.f32 %v1259, 1.0
  %v1285 = vadd.f32 %v1261, 1.0
  %v1286 = vadd.f32 %v1263, 1.0
  %v1287 = vadd.f32 %v1265, 1.0
  %v1288 = vadd.f32 %v1267, 1.0
  %v1289 = vadd.f32 %v1269, 1.0
  %v1290 = vadd.f32 %v1271, 1.0
  %v1291 = vadd.f32 %v1273, 1.0
  %v1292 = vadd.f32 %v1275, 1.0
  %v1293 = vadd.f32 %v1277, 1.0
  %v1294 = vrcp.pop %v1278
  %v1295 = vrcp.pop %v1279
  %v1296 = vrcp.pop %v1280
  %v1297 = vrcp.pop %v1281
  %v1298 = vrcp.pop %v1282
  %v1299 = vrcp.pop %v1283
  %v1300 = vrcp.pop %v1284
  %v1301 = vrcp.pop %v1285
  %v1302 = vrcp.pop %v1286
  %v1303 = vrcp.pop %v1287
  %v1304 = vrcp.pop %v1288
  %v1305 = vrcp.pop %v1289
  %v1306 = vrcp.pop %v1290
  %v1307 = vrcp.pop %v1291
  %v1308 = vrcp.pop %v1292
  %v1309 = vrcp.pop %v1293
  %1310 = vst [vmem:[%s9] sm:$0xff] %v1294
  %1311 = vst [vmem:[%s9 + $0x8] sm:$0xff] %v1295
  %1312 = vst [vmem:[%s9 + $0x10] sm:$0xff] %v1296
  %1313 = vst [vmem:[%s9 + $0x18] sm:$0xff] %v1297
  %1314 = vst [vmem:[%s9 + $0x20] sm:$0xff] %v1298
  %1315 = vst [vmem:[%s9 + $0x28] sm:$0xff] %v1299
  %1316 = vst [vmem:[%s9 + $0x30] sm:$0xff] %v1300
  %1317 = vst [vmem:[%s9 + $0x38] sm:$0xff] %v1301
  %1318 = vst [vmem:[%s9 + $0x40] sm:$0xff] %v1302
  %1319 = vst [vmem:[%s9 + $0x48] sm:$0xff] %v1303
  %1320 = vst [vmem:[%s9 + $0x50] sm:$0xff] %v1304
  %1321 = vst [vmem:[%s9 + $0x58] sm:$0xff] %v1305
  %1322 = vst [vmem:[%s9 + $0x60] sm:$0xff] %v1306
  %1323 = vst [vmem:[%s9 + $0x68] sm:$0xff] %v1307
  %1324 = vst [vmem:[%s9 + $0x70] sm:$0xff] %v1308
  %1325 = vst [vmem:[%s9 + $0x78] sm:$0xff] %v1309
  // Predicated region
  $region38: #{autoencoder_forward.1} parent=0 // pred_check
    _
  $region39: #{autoencoder_forward.1} parent=0 // pred_check_branch
    %1327 = sbr.rel (0) target = $region41
  $region40: #{autoencoder_forward.1} parent=0 // pred_region
    _
  $region41: #{autoencoder_forward.1} parent=0 // pred_fallthru
    _
  // Predicated region
  $region42: #{autoencoder_forward.1} parent=0 // pred_check
    _
  $region43: #{autoencoder_forward.1} parent=0 // pred_check_branch
    %1329 = sbr.rel (0) target = $region45
  $region44: #{autoencoder_forward.1} parent=0 // pred_region
    _
  $region45: #{autoencoder_forward.1} parent=0 // pred_fallthru
    _
  // Predicated region
  $region46: #{autoencoder_forward.1} parent=0 // pred_check
    _
  $region47: #{autoencoder_forward.1} parent=0 // pred_check_branch
    %1331 = sbr.rel (0) target = $region49
  $region48: #{autoencoder_forward.1} parent=0 // pred_region
    _
  $region49: #{autoencoder_forward.1} parent=0 // pred_fallthru
    _
  // Predicated region
  $region50: #{autoencoder_forward.1} parent=0 // pred_check
    _
  $region51: #{autoencoder_forward.1} parent=0 // pred_check_branch
    %1333 = sbr.rel (0) target = $region53
  $region52: #{autoencoder_forward.1} parent=0 // pred_region
    _
  $region53: #{autoencoder_forward.1} parent=0 // pred_fallthru
    _

</llo_original>
